<compile_context>
chip_gen: v6e
topology: v6e:2x2x1
jax: 0.10.0
libtpu: 0.0.40
codegen_flags: <defaults>
</compile_context>

<pallas_src>
import jax
import jax.numpy as jnp
from jax.experimental import pallas as pl
from jax.experimental.pallas import tpu as pltpu


def _round_up(x, m):
    return ((x + m - 1) // m) * m


def _classifier_kernel(x_ref, w_ref, b_ref, o_ref, acc_ref):
    # x_ref : (tile_b, tile_k)   VMEM  — activation tile
    # w_ref : (tile_n, tile_k)   VMEM  — weight tile, PyTorch layout [N, K]
    # b_ref : (1, tile_n)        VMEM  — bias tile
    # o_ref : (tile_b, tile_n)   VMEM  — output tile (lane-dense, 128-aligned)
    # acc_ref: (tile_b, tile_n)  VMEM  f32 accumulator scratch
    k = pl.program_id(2)

    @pl.when(k == 0)
    def _():
        acc_ref[...] = jnp.zeros_like(acc_ref)

    # x @ W^T without transposing W: contract dim 1 of both operands (MXU).
    acc_ref[...] += jax.lax.dot_general(
        x_ref[...],
        w_ref[...],
        dimension_numbers=(((1,), (1,)), ((), ())),
        preferred_element_type=jnp.float32,
    )

    @pl.when(k == pl.num_programs(2) - 1)
    def _():
        o_ref[...] = (acc_ref[...] + b_ref[...]).astype(o_ref.dtype)


def classifier_forward(x, weight, bias, *, tile_b=None, tile_n=None, tile_k=None):
    """y = x @ weight.T + bias  (nn.Linear semantics).

    x:      [B, feature_dim]
    weight: [num_classes, feature_dim]   (PyTorch layout, NOT transposed)
    bias:   [num_classes]
    returns [B, num_classes]  (same dtype as x)
    """
    B, F = x.shape
    N, F_w = weight.shape
    assert F_w == F, "weight feature dim must match x feature dim"
    out_dtype = x.dtype
    itemsize = jnp.dtype(out_dtype).itemsize

    # Sublane packing: f32 -> 8 rows, bf16 -> 16 rows, int8/fp8 -> 32 rows.
    sublane = 8 * max(1, 4 // itemsize)

    # ---- tile selection (VMEM-budgeted, 128-aligned lanes) -----------------
    if tile_b is None:
        tile_b = min(256, _round_up(B, sublane))
    tile_b = _round_up(tile_b, sublane)

    if tile_n is None:
        tile_n = min(256, _round_up(N, 128))
    tile_n = _round_up(tile_n, 128)

    if tile_k is None:
        tile_k = F if F <= 2048 else 512
    if tile_k >= F:
        tile_k = F              # single K step: block equals the full dim
        F_pad = F
    else:
        tile_k = _round_up(tile_k, 128)
        F_pad = _round_up(F, tile_k)

    B_pad = _round_up(B, tile_b)
    N_pad = _round_up(N, tile_n)

    # Cost estimate on the *logical* problem (before padding).
    flops = 2 * B * F * N
    bytes_accessed = (
        B * F * itemsize
        + N * F * jnp.dtype(weight.dtype).itemsize
        + N * jnp.dtype(bias.dtype).itemsize
        + B * N * itemsize
    )

    # ---- zero-pad ragged dims in the wrapper (cheap glue, keeps kernel dense)
    x_p = x
    if (B_pad, F_pad) != (B, F):
        x_p = jnp.pad(x, ((0, B_pad - B), (0, F_pad - F)))
    w_p = weight
    if (N_pad, F_pad) != (N, F):
        w_p = jnp.pad(weight, ((0, N_pad - N), (0, F_pad - F)))
    b2d = bias.reshape(1, N)
    if N_pad != N:
        b2d = jnp.pad(b2d, ((0, 0), (0, N_pad - N)))

    grid = (B_pad // tile_b, N_pad // tile_n, F_pad // tile_k)

    out = pl.pallas_call(
        _classifier_kernel,
        out_shape=jax.ShapeDtypeStruct((B_pad, N_pad), out_dtype),
        grid_spec=pltpu.PrefetchScalarGridSpec(
            num_scalar_prefetch=0,
            grid=grid,
            in_specs=[
                pl.BlockSpec((tile_b, tile_k), lambda i, j, k: (i, k)),
                pl.BlockSpec((tile_n, tile_k), lambda i, j, k: (j, k)),
                pl.BlockSpec((1, tile_n), lambda i, j, k: (0, j)),
            ],
            out_specs=pl.BlockSpec((tile_b, tile_n), lambda i, j, k: (i, j)),
            scratch_shapes=[pltpu.VMEM((tile_b, tile_n), jnp.float32)],
        ),
        compiler_params=pltpu.CompilerParams(
            dimension_semantics=("parallel", "parallel", "arbitrary"),
        ),
        cost_estimate=pl.CostEstimate(
            flops=flops,
            transcendentals=0,
            bytes_accessed=bytes_accessed,
        ),
    )(x_p, w_p, b2d)

    # Slice away lane/row padding (no-op when already aligned).
    return out[:B, :N]


if __name__ == "__main__":
    # Small shapes consistent with the module's forward: x is [batch, feature_dim].
    batch, feature_dim, num_classes = 8, 32, 16

    key = jax.random.PRNGKey(0)
    kx, kw = jax.random.split(key)

    # Deterministic parameter init mirroring the module's __init__:
    #   weight ~ Normal(mean=0, std=0.001), bias = 0
    weight = 0.001 * jax.random.normal(kw, (num_classes, feature_dim), dtype=jnp.float32)
    bias = jnp.zeros((num_classes,), dtype=jnp.float32)

    x = jax.random.normal(kx, (batch, feature_dim), dtype=jnp.float32)

    y = classifier_forward(x, weight, bias)
    y = jax.block_until_ready(y)

    # Reference check against plain JAX (nn.Linear semantics).
    y_ref = x @ weight.T + bias
    assert y.shape == (batch, num_classes)
    assert jnp.allclose(y, y_ref, atol=1e-5, rtol=1e-5)

    print("KERNEL_OK")
</pallas_src>

<mosaic_0001>
module attributes {stable_mosaic.version = 11 : i64} {
  func.func @_classifier_kernel(%arg0: i32, %arg1: i32, %arg2: i32, %arg3: memref<8x32xf32, #tpu.memory_space<vmem>>, %arg4: memref<128x32xf32, #tpu.memory_space<vmem>>, %arg5: memref<1x128xf32, #tpu.memory_space<vmem>>, %arg6: memref<8x128xf32, #tpu.memory_space<vmem>>, %arg7: memref<8x128xf32, #tpu.memory_space<vmem>>) attributes {dimension_semantics = [#tpu.dimension_semantics<parallel>, #tpu.dimension_semantics<parallel>, #tpu.dimension_semantics<arbitrary>], iteration_bounds = array<i64: 1, 1, 1>, scalar_prefetch = 0 : i64, scratch_operands = 1 : i64, tpu.core_type = #tpu.core_type<tc>, window_params = [{transform_indices = @transform_0, window_bounds = array<i64: 8, 32>}, {transform_indices = @transform_1, window_bounds = array<i64: 128, 32>}, {transform_indices = @transform_2, window_bounds = array<i64: 1, 128>}, {transform_indices = @transform_3, window_bounds = array<i64: 8, 128>}]} {
    %c0_i32 = arith.constant 0 : i32
    %0 = arith.cmpi eq, %arg2, %c0_i32 : i32
    %1 = arith.extui %0 : i1 to i32
    %c0_i32_0 = arith.constant 0 : i32
    %2 = arith.cmpi ne, %1, %c0_i32_0 : i32
    scf.if %2 {
      %cst_10 = arith.constant 0.000000e+00 : f32
      %12 = vector.broadcast %cst_10 : f32 to vector<8x128xf32>
      %c0_11 = arith.constant 0 : index
      %c0_12 = arith.constant 0 : index
      %13 = vector.load %arg7[%c0_11, %c0_12] : memref<8x128xf32, #tpu.memory_space<vmem>>, vector<8x128xf32>
      tpu.vector_store %arg7[%c0_11, %c0_12], %12 {strides = array<i32>} : memref<8x128xf32, #tpu.memory_space<vmem>>, vector<8x128xf32>,
    } else {
    }
    %c0 = arith.constant 0 : index
    %c0_1 = arith.constant 0 : index
    %3 = vector.load %arg7[%c0, %c0_1] : memref<8x128xf32, #tpu.memory_space<vmem>>, vector<8x128xf32>
    %c0_2 = arith.constant 0 : index
    %c0_3 = arith.constant 0 : index
    %4 = vector.load %arg3[%c0_2, %c0_3] : memref<8x32xf32, #tpu.memory_space<vmem>>, vector<8x32xf32>
    %c0_4 = arith.constant 0 : index
    %c0_5 = arith.constant 0 : index
    %5 = vector.load %arg4[%c0_4, %c0_5] : memref<128x32xf32, #tpu.memory_space<vmem>>, vector<128x32xf32>
    %cst = arith.constant dense<0.000000e+00> : vector<8x128xf32>
    %6 = tpu.matmul %4, %5, %cst {dimension_numbers = #tpu.dot_dimension_numbers<[1], [1], [0], [0], [0, 0, 1, 0], [], []>} : vector<8x32xf32>, vector<128x32xf32>, vector<8x128xf32> -> vector<8x128xf32>
    %7 = arith.addf %3, %6 : vector<8x128xf32>
    %c0_6 = arith.constant 0 : index
    %c0_7 = arith.constant 0 : index
    %8 = vector.load %arg7[%c0_6, %c0_7] : memref<8x128xf32, #tpu.memory_space<vmem>>, vector<8x128xf32>
    tpu.vector_store %arg7[%c0_6, %c0_7], %7 {strides = array<i32>} : memref<8x128xf32, #tpu.memory_space<vmem>>, vector<8x128xf32>,
    %c0_i32_8 = arith.constant 0 : i32
    %9 = arith.cmpi eq, %arg2, %c0_i32_8 : i32
    %10 = arith.extui %9 : i1 to i32
    %c0_i32_9 = arith.constant 0 : i32
    %11 = arith.cmpi ne, %10, %c0_i32_9 : i32
    scf.if %11 {
      %c0_10 = arith.constant 0 : index
      %c0_11 = arith.constant 0 : index
      %12 = vector.load %arg7[%c0_10, %c0_11] : memref<8x128xf32, #tpu.memory_space<vmem>>, vector<8x128xf32>
      %c0_12 = arith.constant 0 : index
      %c0_13 = arith.constant 0 : index
      %13 = vector.load %arg5[%c0_12, %c0_13] : memref<1x128xf32, #tpu.memory_space<vmem>>, vector<1x128xf32>
      %14 = vector.broadcast %13 : vector<1x128xf32> to vector<8x128xf32>
      %15 = arith.addf %12, %14 : vector<8x128xf32>
      %c0_14 = arith.constant 0 : index
      %c0_15 = arith.constant 0 : index
      %16 = vector.load %arg6[%c0_14, %c0_15] : memref<8x128xf32, #tpu.memory_space<vmem>>, vector<8x128xf32>
      tpu.vector_store %arg6[%c0_14, %c0_15], %15 {strides = array<i32>} : memref<8x128xf32, #tpu.memory_space<vmem>>, vector<8x128xf32>,
    } else {
    }
    return
  }
  func.func @transform_0(%arg0: i32, %arg1: i32, %arg2: i32) -> (i32, i32) {
    %c0_i32 = arith.constant 0 : i32
    return %arg0, %arg2 : i32, i32
  }
  func.func @transform_1(%arg0: i32, %arg1: i32, %arg2: i32) -> (i32, i32) {
    %c0_i32 = arith.constant 0 : i32
    return %arg1, %arg2 : i32, i32
  }
  func.func @transform_2(%arg0: i32, %arg1: i32, %arg2: i32) -> (i32, i32) {
    %c0_i32 = arith.constant 0 : i32
    %c0_i32_0 = arith.constant 0 : i32
    return %c0_i32, %arg1 : i32, i32
  }
  func.func @transform_3(%arg0: i32, %arg1: i32, %arg2: i32) -> (i32, i32) {
    %c0_i32 = arith.constant 0 : i32
    return %arg0, %arg1 : i32, i32
  }
}

</mosaic_0001>

<llo_original>
// kernel: tpu_custom_call.1
$region0: #{tpu_custom_call.1}
  #allocation0 [shape = 'u32[]', space=smem, size = 0x4, offset = 0x4, fixed_abs, tag = 'smem constant byte address 0x4 - core index']
  #allocation1 [shape = 'u32[144,128]{1,0:T(1,128)}', space=vmem, size = 0x12000, scoped, tag = 'internal scratch']
  #allocation2 [shape = 'f32[8,128]{1,0:T(8,128)}', space=vmem, size = 0x1000, scoped, tag = 'scratch operand']
  %s0 = inlined_call_operand.vmem [shape: f32[8,32], index: 0, kind: input, shape index: {}]
  %s1 = inlined_call_operand.vmem [shape: f32[128,32], index: 1, kind: input, shape index: {}]
  %s2 = inlined_call_operand.vmem [shape: f32[1,128], index: 2, kind: input, shape index: {}]
  %s3 = inlined_call_operand.hbm [shape: f32[8,128], index: 3, kind: output, shape index: {}]
  %s4 = sld [smem:[#allocation0]]
  $region30: #{tpu_custom_call.1} parent=0
    _
  %s6 = ssub.s32 1, %s4
  %s7 = scalar_select 0, %s6, %s4
  $region1: #{tpu_custom_call.1} parent=0
    #allocation3 [shape = 'u8[4096]{0}', space=vmem, size = 0x1000, scoped, tag = 'output window, operand 0, single buffered']
    #allocation4 [shape = 's32[1]{0}', space=sflag, size = 0x4, scoped, tag = 'scoped memory for tpu_custom_call.1']
    %8 = vsyncpa [#allocation4], 0
    // Predicated region
    $region2: #{tpu_custom_call.1} parent=1 // pred_check
      _
    $region3: #{tpu_custom_call.1} parent=1 // pred_check_branch
      %10 = sbr.rel (0) target = $region5
    $region4: #{tpu_custom_call.1} parent=1 // pred_region
      _
    $region5: #{tpu_custom_call.1} parent=1 // pred_fallthru
      _
    // Predicated region
    $region6: #{tpu_custom_call.1} parent=1 // pred_check
      _
    $region7: #{tpu_custom_call.1} parent=1 // pred_check_branch
      %12 = sbr.rel (0) target = $region9
    $region8: #{tpu_custom_call.1} parent=1 // pred_region
      _
    $region9: #{tpu_custom_call.1} parent=1 // pred_fallthru
      _
    // Predicated region
    $region10: #{tpu_custom_call.1} parent=1 // pred_check
      _
    $region11: #{tpu_custom_call.1} parent=1 // pred_check_branch
      %14 = sbr.rel (0) target = $region13
    $region12: #{tpu_custom_call.1} parent=1 // pred_region
      _
    $region13: #{tpu_custom_call.1} parent=1 // pred_fallthru
      _
    %p15 = scmp.eq.s32.totalorder 0, 0
    // Predicated region
    $region14: #{tpu_custom_call.1} parent=1 // pred_check
      %p16 = pneg %p15
    $region15: #{tpu_custom_call.1} parent=1 // pred_check_branch
      %18 = sbr.rel (%p16) target = $region17
    $region16: #{tpu_custom_call.1} parent=1 // pred_region
      %19 = vst [vmem:[#allocation2] sm:$0xff] 0.0
    $region17: #{tpu_custom_call.1} parent=1 // pred_fallthru
      _
    %v20 = vld [vmem:[#allocation2] sm:$0xff]
    %v21 = vld [vmem:[%s0] sm:$0xff]
    %v22 = vld [vmem:[%s1] sm:$0xff]
    %v23 = vld [vmem:[%s1 + $0x8] sm:$0xff]
    %v24 = vld [vmem:[%s1 + $0x10] sm:$0xff]
    %v25 = vld [vmem:[%s1 + $0x18] sm:$0xff]
    %v26 = vld [vmem:[%s1 + $0x20] sm:$0xff]
    %v27 = vld [vmem:[%s1 + $0x28] sm:$0xff]
    %v28 = vld [vmem:[%s1 + $0x30] sm:$0xff]
    %v29 = vld [vmem:[%s1 + $0x38] sm:$0xff]
    %v30 = vld [vmem:[%s1 + $0x40] sm:$0xff]
    %v31 = vld [vmem:[%s1 + $0x48] sm:$0xff]
    %v32 = vld [vmem:[%s1 + $0x50] sm:$0xff]
    %v33 = vld [vmem:[%s1 + $0x58] sm:$0xff]
    %v34 = vld [vmem:[%s1 + $0x60] sm:$0xff]
    %v35 = vld [vmem:[%s1 + $0x68] sm:$0xff]
    %v36 = vld [vmem:[%s1 + $0x70] sm:$0xff]
    %v37 = vld [vmem:[%s1 + $0x78] sm:$0xff]
    %vm38 = vcmask 261120
    %v40 = vsel %vm38, %v21, 0
    %v43 = vsel %vm38, %v22, 0
    %v46 = vsel %vm38, %v23, 0
    %v49 = vsel %vm38, %v24, 0
    %v52 = vsel %vm38, %v25, 0
    %v55 = vsel %vm38, %v26, 0
    %v58 = vsel %vm38, %v27, 0
    %v61 = vsel %vm38, %v28, 0
    %v64 = vsel %vm38, %v29, 0
    %v67 = vsel %vm38, %v30, 0
    %v70 = vsel %vm38, %v31, 0
    %v73 = vsel %vm38, %v32, 0
    %v76 = vsel %vm38, %v33, 0
    %v79 = vsel %vm38, %v34, 0
    %v82 = vsel %vm38, %v35, 0
    %v85 = vsel %vm38, %v36, 0
    %v88 = vsel %vm38, %v37, 0
    %90 = vmatprep.subr.mxu0 0.0
    %91 = vmatpush1.xpose.msra.mxu0 %v88
    %92 = vmatprep.subr.mxu0 0.0
    %93 = vmatpush1.xpose.msra.mxu0 %v85
    %94 = vmatprep.subr.mxu0 0.0
    %95 = vmatpush1.xpose.msra.mxu0 %v82
    %96 = vmatprep.subr.mxu0 0.0
    %97 = vmatpush1.xpose.msra.mxu0 %v79
    %98 = vmatprep.subr.mxu0 0.0
    %99 = vmatpush1.xpose.msra.mxu0 %v76
    %100 = vmatprep.subr.mxu0 0.0
    %101 = vmatpush1.xpose.msra.mxu0 %v73
    %102 = vmatprep.subr.mxu0 0.0
    %103 = vmatpush1.xpose.msra.mxu0 %v70
    %104 = vmatprep.subr.mxu0 0.0
    %105 = vmatpush1.xpose.msra.mxu0 %v67
    %106 = vmatprep.subr.mxu0 0.0
    %107 = vmatpush1.xpose.msra.mxu0 %v64
    %108 = vmatprep.subr.mxu0 0.0
    %109 = vmatpush1.xpose.msra.mxu0 %v61
    %110 = vmatprep.subr.mxu0 0.0
    %111 = vmatpush1.xpose.msra.mxu0 %v58
    %112 = vmatprep.subr.mxu0 0.0
    %113 = vmatpush1.xpose.msra.mxu0 %v55
    %114 = vmatprep.subr.mxu0 0.0
    %115 = vmatpush1.xpose.msra.mxu0 %v52
    %116 = vmatprep.subr.mxu0 0.0
    %117 = vmatpush1.xpose.msra.mxu0 %v49
    %118 = vmatprep.subr.mxu0 0.0
    %119 = vmatpush1.xpose.msra.mxu0 %v46
    %120 = vmatprep.subr.mxu0 0.0
    %121 = vmatpush1.xpose.msra.mxu0 %v43
    %122 = vmatprep.subr.mxu0 0.0
    %123 = vmatpush2.xpose.msra.mxu0 0.0
    %124 = vmatprep.subr.mxu0 0.0
    %125 = vmatpush2.xpose.msra.mxu0 0.0
    %126 = vmatprep.subr.mxu0 0.0
    %127 = vmatpush2.xpose.msra.mxu0 0.0
    %128 = vmatprep.subr.mxu0 0.0
    %129 = vmatpush2.xpose.msra.mxu0 0.0
    %130 = vmatprep.subr.mxu0 0.0
    %131 = vmatpush2.xpose.msra.mxu0 0.0
    %132 = vmatprep.subr.mxu0 0.0
    %133 = vmatpush2.xpose.msra.mxu0 0.0
    %134 = vmatprep.subr.mxu0 0.0
    %135 = vmatpush2.xpose.msra.mxu0 0.0
    %136 = vmatprep.subr.mxu0 0.0
    %137 = vmatpush2.xpose.msra.mxu0 0.0
    %138 = vmatprep.subr.mxu0 0.0
    %139 = vmatpush2.xpose.msra.mxu0 0.0
    %140 = vmatprep.subr.mxu0 0.0
    %141 = vmatpush2.xpose.msra.mxu0 0.0
    %142 = vmatprep.subr.mxu0 0.0
    %143 = vmatpush2.xpose.msra.mxu0 0.0
    %144 = vmatprep.subr.mxu0 0.0
    %145 = vmatpush2.xpose.msra.mxu0 0.0
    %146 = vmatprep.subr.mxu0 0.0
    %147 = vmatpush2.xpose.msra.mxu0 0.0
    %148 = vmatprep.subr.mxu0 0.0
    %149 = vmatpush2.xpose.msra.mxu0 0.0
    %150 = vmatprep.subr.mxu0 0.0
    %151 = vmatpush2.xpose.msra.mxu0 0.0
    %152 = vmatprep.subr.mxu0 0.0
    %153 = vmatpush2.xpose.msra.mxu0 0.0
    %154 = vmatprep.mubr.f32.mxu0 0.0
    %155 = vmatmul.mubr.f32.gmra.mxu0 %v40
    %v156 = vpop.f32.mrf.mxu0
    %v157 = vadd.f32 0.0, %v156
    %v158 = vpop.f32.mrf.mxu0
    %159 = vdwg.mxu0
    %v160 = vadd.f32 %v20, %v157
    %161 = vst [vmem:[#allocation2] sm:$0xff] %v160
    // Predicated region
    $region18: #{tpu_custom_call.1} parent=1 // pred_check
      %p162 = pneg %p15
    $region19: #{tpu_custom_call.1} parent=1 // pred_check_branch
      %164 = sbr.rel (%p162) target = $region21
    $region20: #{tpu_custom_call.1} parent=1 // pred_region
      %v165 = vld [vmem:[#allocation2] sm:$0xff]
      %v166 = vld [vmem:[%s2] sm:$0x1]
      %v168 = vlaneseq
      %v169 = vshrl.u32 %v168, 7
      %v170 = vsub.s32 0, %v169
      %v171 = vrot.slane %v166, %v170
      %v173 = vadd.f32 %v165, %v171
      %174 = vst [vmem:[#allocation3] sm:$0xff] %v173
    $region21: #{tpu_custom_call.1} parent=1 // pred_fallthru
      _
    // Predicated region
    $region22: #{tpu_custom_call.1} parent=1 // pred_check
      _
    $region23: #{tpu_custom_call.1} parent=1 // pred_check_branch
      %176 = sbr.rel (0) target = $region25
    $region24: #{tpu_custom_call.1} parent=1 // pred_region
      %s178 = ssub.s32 128, 128
      %179 = vsyncadd [#allocation4], %s178
      %s181 = sshll.u32 [#allocation3], 4
      %s182 = int_to_ptr.vmem [resolvable:$true] %s181
      %184 = dma.vmem_to_hbm [thread:$0]  %s182, 128, %s3, [#allocation4]
    $region25: #{tpu_custom_call.1} parent=1 // pred_fallthru
      _
    // Predicated region
    $region26: #{tpu_custom_call.1} parent=1 // pred_check
      _
    $region27: #{tpu_custom_call.1} parent=1 // pred_check_branch
      %186 = sbr.rel (0) target = $region29
    $region28: #{tpu_custom_call.1} parent=1 // pred_region
      %187 = dma.done [#allocation4], 128
    $region29: #{tpu_custom_call.1} parent=1 // pred_fallthru
      _
    %188 = vsyncpa [#allocation4], 1

</llo_original>
